<compile_context>
chip_gen: v5e
topology: v5e:2x2
jax: 0.10.0
libtpu: 0.0.40
codegen_flags: <defaults>
</compile_context>

<pallas_src>
import math

import jax
import jax.numpy as jnp
from jax.experimental import pallas as pl
from jax.experimental.pallas import tpu as pltpu

NUM_LAYERS = 3
HIDDEN = 2            # the module hard-codes torch.nn.Linear(2, 2)
LANES = 128           # lane width of the flat view; channels alternate on even/odd lanes
MAX_ROW_TILE = 2048   # 2048 x 128 f32 = 1 MiB per block


def _round_up(x, m):
    return ((x + m - 1) // m) * m


def _nxd_kernel(x_ref, w_ref, b_ref, o_ref):
    """Folded affine y = x @ Wf + bf on a channel-interleaved, lane-dense tile.

    x_ref : (R_TILE, LANES) f32 VMEM — flat (B*S*2,) activations viewed 2-D;
            channel 0 sits on even lanes, channel 1 on odd lanes.
    w_ref : (4,) f32 SMEM — folded transposed weight, row-major [w00, w01, w10, w11]
            (y_j = sum_i x_i * w[i, j] + b_j).
    b_ref : (2,) f32 SMEM — folded bias [b0, b1].
    o_ref : (R_TILE, LANES) f32 VMEM.
    """
    x = x_ref[...]
    c = x.shape[-1]

    # Lane parity tells us which channel a lane carries.
    lane = jax.lax.broadcasted_iota(jnp.int32, (1, c), 1)
    even = (lane & 1) == 0                       # True on channel-0 lanes

    # Per-lane affine coefficients (alternating by channel), splatted from SMEM scalars.
    a_coef = jnp.where(even, w_ref[0], w_ref[3])   # diag terms  w00 / w11
    b_coef = jnp.where(even, w_ref[2], w_ref[1])   # cross terms w10 / w01
    bias = jnp.where(even, b_ref[0], b_ref[1])

    # Partner value x[lane ^ 1]: two single-lane rotations plus a selection keyed off
    # an identically-rotated iota, so the result does not depend on the hardware
    # rotate-direction convention.  Wrapped boundary lanes are never selected because
    # pairs are aligned to even lanes.  (Iota rolled as f32: exact for values < 2^24.)
    r1 = pltpu.roll(x, 1, axis=1)
    r2 = pltpu.roll(x, c - 1, axis=1)
    i1 = pltpu.roll(lane.astype(jnp.float32), 1, axis=1)
    partner = (lane ^ 1).astype(jnp.float32)
    x_swap = jnp.where(i1 == partner, r1, r2)

    # One full-width, fully dense store (no concatenate / masked vst).
    o_ref[...] = a_coef * x + b_coef * x_swap + bias


def _fold_layers(weights_t, biases):
    """Compose y = (((x @ Wt1 + b1) @ Wt2 + b2) ...) into a single affine y = x @ Wf + bf."""
    num_layers, hidden, _ = weights_t.shape
    wf = jnp.eye(hidden, dtype=jnp.float32)
    bf = jnp.zeros((hidden,), dtype=jnp.float32)
    for l in range(num_layers):
        wf = wf @ weights_t[l]
        bf = bf @ weights_t[l] + biases[l]
    return wf, bf


def nxd_module_forward(inputs_embeds, weights_t, biases):
    """inputs_embeds: (B, S, 2) f32; weights_t: (L, 2, 2) = W^T; biases: (L, 2)."""
    batch, seq, hidden = inputs_embeds.shape
    assert hidden == HIDDEN == 2, "NxDModule hard-codes nn.Linear(2, 2)"

    # Fold the L Linear(2, 2) layers into one 2x2 affine (exact linear composition).
    wf, bf = _fold_layers(weights_t.astype(jnp.float32), biases.astype(jnp.float32))
    w_flat = wf.reshape(HIDDEN * HIDDEN)   # [w00, w01, w10, w11]
    b_flat = bf.reshape(HIDDEN)

    # Zero-copy channel-interleaved view: flat (B*S*2,) -> (rows, 128).  Channel 0
    # lands on even lanes, channel 1 on odd lanes.  Only padding (if any) moves data.
    total = batch * seq * hidden
    flat = inputs_embeds.reshape(total).astype(jnp.float32)

    n_rows = pl.cdiv(total, LANES)
    if n_rows > MAX_ROW_TILE:
        row_tile = MAX_ROW_TILE            # 1 MiB blocks, grid >= 2 (both v7x cores busy)
    else:
        row_tile = _round_up(n_rows, 8)    # one dense block for small inputs
    padded_rows = _round_up(n_rows, row_tile)
    padded_total = padded_rows * LANES
    if padded_total != total:
        flat = jnp.pad(flat, (0, padded_total - total))
    x2d = flat.reshape(padded_rows, LANES)

    out = pl.pallas_call(
        _nxd_kernel,
        out_shape=jax.ShapeDtypeStruct((padded_rows, LANES), jnp.float32),
        grid_spec=pl.GridSpec(
            grid=(padded_rows // row_tile,),
            in_specs=[
                pl.BlockSpec((row_tile, LANES), lambda i: (i, 0)),
                pl.BlockSpec(memory_space=pltpu.MemorySpace.SMEM),
                pl.BlockSpec(memory_space=pltpu.MemorySpace.SMEM),
            ],
            out_specs=pl.BlockSpec((row_tile, LANES), lambda i: (i, 0)),
        ),
        compiler_params=pltpu.CompilerParams(
            dimension_semantics=("parallel",),
        ),
    )(x2d, w_flat, b_flat)

    return out.reshape(padded_total)[:total].reshape(batch, seq, hidden)


def init_params(key, num_layers, hidden):
    """Deterministic torch.nn.Linear-style init: U(-1/sqrt(fan_in), 1/sqrt(fan_in))."""
    bound = 1.0 / math.sqrt(hidden)
    kw, kb = jax.random.split(key)
    # PyTorch Linear weight is (out, in); we store the transpose (in, out).
    w = jax.random.uniform(kw, (num_layers, hidden, hidden),
                           minval=-bound, maxval=bound, dtype=jnp.float32)
    w_t = jnp.swapaxes(w, -1, -2)
    b = jax.random.uniform(kb, (num_layers, hidden),
                           minval=-bound, maxval=bound, dtype=jnp.float32)
    return w_t, b


if __name__ == "__main__":
    key = jax.random.PRNGKey(0)
    k_x, k_x2, k_p = jax.random.split(key, 3)

    weights_t, biases = init_params(k_p, NUM_LAYERS, HIDDEN)

    def reference(x):
        ref = x
        for l in range(NUM_LAYERS):
            ref = ref @ weights_t[l] + biases[l]
        return ref

    # Small shape matching the test harness (exercises the padded path).
    batch, seq = 2, 8
    inputs_embeds = jax.random.normal(k_x, (batch, seq, HIDDEN), dtype=jnp.float32)
    out = nxd_module_forward(inputs_embeds, weights_t, biases)
    jax.block_until_ready(out)
    assert jnp.allclose(out, reference(inputs_embeds), atol=1e-5, rtol=1e-5), \
        "mismatch vs reference (small)"

    # Slightly larger shape (exercises the exact-fit / no-padding path).
    x_big = jax.random.normal(k_x2, (4, 1024, HIDDEN), dtype=jnp.float32)
    out_big = nxd_module_forward(x_big, weights_t, biases)
    jax.block_until_ready(out_big)
    assert jnp.allclose(out_big, reference(x_big), atol=1e-5, rtol=1e-5), \
        "mismatch vs reference (large)"

    print("KERNEL_OK")
</pallas_src>

<mosaic_0001>
module attributes {stable_mosaic.version = 11 : i64} {
  func.func @_nxd_kernel(%arg0: i32, %arg1: memref<8x128xf32, #tpu.memory_space<vmem>>, %arg2: memref<4xf32, #tpu.memory_space<smem>>, %arg3: memref<2xf32, #tpu.memory_space<smem>>, %arg4: memref<8x128xf32, #tpu.memory_space<vmem>>) attributes {dimension_semantics = [#tpu.dimension_semantics<parallel>], iteration_bounds = array<i64: 1>, scalar_prefetch = 0 : i64, scratch_operands = 0 : i64, tpu.core_type = #tpu.core_type<tc>, window_params = [{transform_indices = @transform_0, window_bounds = array<i64: 8, 128>}, {transform_indices = @transform_1, window_bounds = array<i64: 4>}, {transform_indices = @transform_2, window_bounds = array<i64: 2>}, {transform_indices = @transform_3, window_bounds = array<i64: 8, 128>}]} {
    %c0 = arith.constant 0 : index
    %c0_0 = arith.constant 0 : index
    %0 = vector.load %arg1[%c0, %c0_0] : memref<8x128xf32, #tpu.memory_space<vmem>>, vector<8x128xf32>
    %1 = tpu.iota {dimensions = array<i32: 1>} : vector<1x128xi32>
    %c1_i32 = arith.constant 1 : i32
    %2 = vector.broadcast %c1_i32 : i32 to vector<1x128xi32>
    %3 = arith.andi %1, %2 : vector<1x128xi32>
    %c0_i32 = arith.constant 0 : i32
    %4 = vector.broadcast %c0_i32 : i32 to vector<1x128xi32>
    %5 = arith.cmpi eq, %3, %4 : vector<1x128xi32>
    %c0_1 = arith.constant 0 : index
    %6 = memref.load %arg2[%c0_1] : memref<4xf32, #tpu.memory_space<smem>>
    %c3 = arith.constant 3 : index
    %7 = memref.load %arg2[%c3] : memref<4xf32, #tpu.memory_space<smem>>
    %8 = vector.broadcast %6 : f32 to vector<1x128xf32>
    %9 = vector.broadcast %7 : f32 to vector<1x128xf32>
    %10 = arith.select %5, %8, %9 : vector<1x128xi1>, vector<1x128xf32>
    %c2 = arith.constant 2 : index
    %11 = memref.load %arg2[%c2] : memref<4xf32, #tpu.memory_space<smem>>
    %c1 = arith.constant 1 : index
    %12 = memref.load %arg2[%c1] : memref<4xf32, #tpu.memory_space<smem>>
    %13 = vector.broadcast %11 : f32 to vector<1x128xf32>
    %14 = vector.broadcast %12 : f32 to vector<1x128xf32>
    %15 = arith.select %5, %13, %14 : vector<1x128xi1>, vector<1x128xf32>
    %c0_2 = arith.constant 0 : index
    %16 = memref.load %arg3[%c0_2] : memref<2xf32, #tpu.memory_space<smem>>
    %c1_3 = arith.constant 1 : index
    %17 = memref.load %arg3[%c1_3] : memref<2xf32, #tpu.memory_space<smem>>
    %18 = vector.broadcast %16 : f32 to vector<1x128xf32>
    %19 = vector.broadcast %17 : f32 to vector<1x128xf32>
    %20 = arith.select %5, %18, %19 : vector<1x128xi1>, vector<1x128xf32>
    %c1_i32_4 = arith.constant 1 : i32
    %21 = tpu.dynamic_rotate %0 by %c1_i32_4 dim 1 : vector<8x128xf32>, i32 -> vector<8x128xf32>
    %c127_i32 = arith.constant 127 : i32
    %22 = tpu.dynamic_rotate %0 by %c127_i32 dim 1 : vector<8x128xf32>, i32 -> vector<8x128xf32>
    %23 = arith.sitofp %1 : vector<1x128xi32> to vector<1x128xf32>
    %c1_i32_5 = arith.constant 1 : i32
    %24 = tpu.dynamic_rotate %23 by %c1_i32_5 dim 1 : vector<1x128xf32>, i32 -> vector<1x128xf32>
    %c1_i32_6 = arith.constant 1 : i32
    %25 = vector.broadcast %c1_i32_6 : i32 to vector<1x128xi32>
    %26 = arith.xori %1, %25 : vector<1x128xi32>
    %27 = arith.sitofp %26 : vector<1x128xi32> to vector<1x128xf32>
    %28 = arith.cmpf oeq, %24, %27 : vector<1x128xf32>
    %29 = vector.shape_cast %28 : vector<1x128xi1> to vector<1x128xi1>
    %30 = vector.broadcast %29 : vector<1x128xi1> to vector<8x128xi1>
    %31 = arith.select %30, %21, %22 : vector<8x128xi1>, vector<8x128xf32>
    %32 = vector.broadcast %10 : vector<1x128xf32> to vector<8x128xf32>
    %33 = arith.mulf %32, %0 : vector<8x128xf32>
    %34 = vector.broadcast %15 : vector<1x128xf32> to vector<8x128xf32>
    %35 = arith.mulf %34, %31 : vector<8x128xf32>
    %36 = arith.addf %33, %35 : vector<8x128xf32>
    %37 = vector.broadcast %20 : vector<1x128xf32> to vector<8x128xf32>
    %38 = arith.addf %36, %37 : vector<8x128xf32>
    %c0_7 = arith.constant 0 : index
    %c0_8 = arith.constant 0 : index
    %39 = vector.load %arg4[%c0_7, %c0_8] : memref<8x128xf32, #tpu.memory_space<vmem>>, vector<8x128xf32>
    tpu.vector_store %arg4[%c0_7, %c0_8], %38 {strides = array<i32>} : memref<8x128xf32, #tpu.memory_space<vmem>>, vector<8x128xf32>,
    return
  }
  func.func @transform_0(%arg0: i32) -> (i32, i32) {
    %c0_i32 = arith.constant 0 : i32
    %c0_i32_0 = arith.constant 0 : i32
    return %arg0, %c0_i32 : i32, i32
  }
  func.func @transform_1(%arg0: i32) -> i32 {
    %c0_i32 = arith.constant 0 : i32
    %c0_i32_0 = arith.constant 0 : i32
    return %c0_i32 : i32
  }
  func.func @transform_2(%arg0: i32) -> i32 {
    %c0_i32 = arith.constant 0 : i32
    %c0_i32_0 = arith.constant 0 : i32
    return %c0_i32 : i32
  }
  func.func @transform_3(%arg0: i32) -> (i32, i32) {
    %c0_i32 = arith.constant 0 : i32
    %c0_i32_0 = arith.constant 0 : i32
    return %arg0, %c0_i32 : i32, i32
  }
}

</mosaic_0001>

<llo_original>
// kernel: tpu_custom_call.1
$region0: #{tpu_custom_call.1}
  #allocation0 [shape = 'u32[]', space=smem, size = 0x4, offset = 0x4, fixed_abs, tag = 'smem constant byte address 0x4 - core index']
  #allocation1 [shape = 'u32[72,128]{1,0:T(1,128)}', space=vmem, size = 0x9000, scoped, tag = 'internal scratch']
  %s0 = inlined_call_operand.hbm [shape: f32[8,128], index: 0, kind: input, shape index: {}]
  %s1 = inlined_call_operand.hbm [shape: f32[4], index: 1, kind: input, shape index: {}]
  %s2 = inlined_call_operand.vmem [shape: f32[2], index: 2, kind: input, shape index: {}]
  %s3 = inlined_call_operand.hbm [shape: f32[8,128], index: 3, kind: output, shape index: {}]
  %s4 = sld [smem:[#allocation0]]
  $region34: #{tpu_custom_call.1} parent=0
    _
  %s6 = ssub.s32 1, %s4
  %s7 = scalar_select 0, %s6, %s4
  $region1: #{tpu_custom_call.1} parent=0
    #allocation2 [shape = 'u8[4096]{0}', space=vmem, size = 0x1000, scoped, tag = 'input window, operand 0, single buffered']
    #allocation3 [shape = 's32[1]{0}', space=sflag, size = 0x4, scoped, tag = 'scoped memory for tpu_custom_call.1']
    #allocation4 [shape = 's32[1]{0}', space=sflag, size = 0x4, scoped, tag = 'scoped memory for tpu_custom_call.1']
    #allocation5 [shape = 's32[1]{0}', space=sflag, size = 0x4, scoped, tag = 'scoped memory for tpu_custom_call.1']
    #allocation6 [shape = 's32[1]{0}', space=sflag, size = 0x4, scoped, tag = 'scoped memory for tpu_custom_call.1']
    #allocation7 [shape = 'u8[512]{0}', space=smem, size = 0x200, scoped, tag = 'input window, operand 1, single buffered']
    #allocation8 [shape = 'u8[512]{0}', space=smem, size = 0x200, scoped, tag = 'input window, operand 2, single buffered']
    #allocation9 [shape = 'u8[4096]{0}', space=vmem, size = 0x1000, scoped, tag = 'output window, operand 0, single buffered']
    %8 = vsyncpa [#allocation3], 0
    %9 = vsyncpa [#allocation5], 0
    %10 = vsyncpa [#allocation6], 0
    %11 = vsyncpa [#allocation4], 0
    // Predicated region
    $region2: #{tpu_custom_call.1} parent=1 // pred_check
      _
    $region3: #{tpu_custom_call.1} parent=1 // pred_check_branch
      %13 = sbr.rel (0) target = $region5
    $region4: #{tpu_custom_call.1} parent=1 // pred_region
      %15 = vsyncadd [#allocation3], 0
      %s17 = sshll.u32 %s0, 4
      %s18 = int_to_ptr.hbm [resolvable:$true] %s17
      %s19 = sshll.u32 [#allocation2], 4
      %s20 = int_to_ptr.vmem [resolvable:$true] %s19
      %22 = dma.hbm_to_vmem [thread:$0]  %s18, 128, %s20, [#allocation3]
    $region5: #{tpu_custom_call.1} parent=1 // pred_fallthru
      _
    // Predicated region
    $region6: #{tpu_custom_call.1} parent=1 // pred_check
      _
    $region7: #{tpu_custom_call.1} parent=1 // pred_check_branch
      %24 = sbr.rel (0) target = $region9
    $region8: #{tpu_custom_call.1} parent=1 // pred_region
      %26 = vsyncadd [#allocation5], 0
      %s28 = sshll.u32 %s1, 4
      %s29 = int_to_ptr.hbm [resolvable:$true] %s28
      %31 = dma.hbm_to_smem %s29, 16, [#allocation7], [#allocation5]
    $region9: #{tpu_custom_call.1} parent=1 // pred_fallthru
      _
    // Predicated region
    $region10: #{tpu_custom_call.1} parent=1 // pred_check
      _
    $region11: #{tpu_custom_call.1} parent=1 // pred_check_branch
      %33 = sbr.rel (0) target = $region13
    $region12: #{tpu_custom_call.1} parent=1 // pred_region
      %35 = vsyncadd [#allocation6], 0
      %s37 = sshll.u32 %s2, 4
      %s38 = int_to_ptr.vmem [resolvable:$true] %s37
      %40 = dma.vmem_to_smem %s38, 16, [#allocation8], [#allocation6]
    $region13: #{tpu_custom_call.1} parent=1 // pred_fallthru
      _
    // Predicated region
    $region14: #{tpu_custom_call.1} parent=1 // pred_check
      _
    $region15: #{tpu_custom_call.1} parent=1 // pred_check_branch
      %42 = sbr.rel (0) target = $region17
    $region16: #{tpu_custom_call.1} parent=1 // pred_region
      %44 = dma.done [#allocation3], 128
    $region17: #{tpu_custom_call.1} parent=1 // pred_fallthru
      _
    // Predicated region
    $region18: #{tpu_custom_call.1} parent=1 // pred_check
      _
    $region19: #{tpu_custom_call.1} parent=1 // pred_check_branch
      %46 = sbr.rel (0) target = $region21
    $region20: #{tpu_custom_call.1} parent=1 // pred_region
      %48 = dma.done [#allocation5], 16
    $region21: #{tpu_custom_call.1} parent=1 // pred_fallthru
      _
    // Predicated region
    $region22: #{tpu_custom_call.1} parent=1 // pred_check
      _
    $region23: #{tpu_custom_call.1} parent=1 // pred_check_branch
      %50 = sbr.rel (0) target = $region25
    $region24: #{tpu_custom_call.1} parent=1 // pred_region
      %52 = dma.done [#allocation6], 16
    $region25: #{tpu_custom_call.1} parent=1 // pred_fallthru
      _
    %53 = sfence
    %v54 = vld [vmem:[#allocation2] sm:$0xff]
    %v55 = vlaneseq
    %v56 = vand.u32 %v55, 127
    %v57 = vand.u32 %v56, 1
    %vm58 = vcmp.eq.s32.totalorder %v57, 0
    %s59 = sld [smem:[#allocation7]]
    %s60 = sld [smem:[#allocation7 + $0x3]]
    %v61 = vstv %s59
    %v62 = vstv %s60
    %v63 = vsel %vm58, %v61, %v62
    %s64 = sld [smem:[#allocation7 + $0x2]]
    %s65 = sld [smem:[#allocation7 + $0x1]]
    %v66 = vstv %s64
    %v67 = vstv %s65
    %v68 = vsel %vm58, %v66, %v67
    %s69 = sld [smem:[#allocation8]]
    %s70 = sld [smem:[#allocation8 + $0x1]]
    %v71 = vstv %s69
    %v72 = vstv %s70
    %v73 = vsel %vm58, %v71, %v72
    %74 = vrot.lane.b32.xlu0 %v54, 1
    %v75 = vpop.permute.xlu0 %74
    %76 = vrot.lane.b32.xlu0 %v54, 127
    %v77 = vpop.permute.xlu0 %76
    %v78 = vcvt.s32.f32 %v56
    %79 = vrot.lane.b32.xlu0 %v78, 1
    %v80 = vpop.permute.xlu0 %79
    %v81 = vxor.u32 %v56, 1
    %v82 = vcvt.s32.f32 %v81
    %vm83 = vcmp.eq.f32.partialorder %v80, %v82
    %v84 = vsel %vm83, 1, 0
    %v85 = vperm.slane %v84, 0
    %vm86 = vcmp.eq.s32.totalorder %v85, 1
    %v87 = vsel %vm86, %v75, %v77
    %v88 = vmul.f32 %v63, %v54
    %v89 = vmul.f32 %v68, %v87
    %v90 = vadd.f32 %v88, %v89
    %v91 = vadd.f32 %v90, %v73
    %92 = vst [vmem:[#allocation9] sm:$0xff] %v91
    // Predicated region
    $region26: #{tpu_custom_call.1} parent=1 // pred_check
      _
    $region27: #{tpu_custom_call.1} parent=1 // pred_check_branch
      %94 = sbr.rel (0) target = $region29
    $region28: #{tpu_custom_call.1} parent=1 // pred_region
      %96 = vsyncadd [#allocation4], 0
      %s98 = sshll.u32 [#allocation9], 4
      %s99 = int_to_ptr.vmem [resolvable:$true] %s98
      %s100 = sshll.u32 %s3, 4
      %s101 = int_to_ptr.hbm [resolvable:$true] %s100
      %103 = dma.vmem_to_hbm [thread:$0]  %s99, 128, %s101, [#allocation4]
    $region29: #{tpu_custom_call.1} parent=1 // pred_fallthru
      _
    // Predicated region
    $region30: #{tpu_custom_call.1} parent=1 // pred_check
      _
    $region31: #{tpu_custom_call.1} parent=1 // pred_check_branch
      %105 = sbr.rel (0) target = $region33
    $region32: #{tpu_custom_call.1} parent=1 // pred_region
      %107 = dma.done [#allocation4], 128
    $region33: #{tpu_custom_call.1} parent=1 // pred_fallthru
      _
    %108 = vsyncpa [#allocation3], 1
    %109 = vsyncpa [#allocation4], 1
    %110 = vsyncpa [#allocation5], 1
    %111 = vsyncpa [#allocation6], 1

</llo_original>
